<compile_context>
chip_gen: v7x
topology: tpu7x:2x2x1
jax: 0.10.0
libtpu: 0.0.40
codegen_flags: <defaults>
</compile_context>

<pallas_src>
import math

import jax
import jax.numpy as jnp
from jax.experimental import pallas as pl
from jax.experimental.pallas import tpu as pltpu


def _colsum_kernel(x2_ref, o_ref, acc_ref):
    # x2_ref: (rows, s_tile, D) block; o_ref: (rows, D); acc_ref: f32 scratch.
    si = pl.program_id(1)

    @pl.when(si == 0)
    def _():
        acc_ref[...] = jnp.zeros_like(acc_ref)

    # f32-accumulated reduction over the S tile (no materialized upcast).
    acc_ref[...] += jnp.sum(x2_ref[...], axis=1, dtype=jnp.float32)

    @pl.when(si == pl.num_programs(1) - 1)
    def _():
        o_ref[...] = acc_ref[...].astype(o_ref.dtype)


def _round_up(x, m):
    return ((x + m - 1) // m) * m


def _plan_tiling(bh, s, d, itemsize, budget_bytes, min_row_steps=8):
    """Pick (rows, s_tile, bh_pad, s_pad).

    `budget_bytes` bounds the double-buffered input block.  `rows` and `s_tile`
    are multiples of 8 (sublane constraint) unless they equal the full axis;
    padded extents are returned so the wrapper can zero-pad (exact for a sum).
    """
    # 1) S tile: keep full S if an 8-row full-S block fits the budget,
    #    otherwise the largest multiple of 8 that does.
    bytes_per_8row_1s = 2 * 8 * d * itemsize          # dbl-buffered, 8 rows, 1 S elem
    max_s = max(8, budget_bytes // bytes_per_8row_1s)
    if s <= max_s:
        s_tile, s_pad = s, s
    else:
        s_tile = max(8, (max_s // 8) * 8)
        s_pad = _round_up(s, s_tile)

    # 2) rows: largest multiple of 8 fitting the budget, capped so the fused
    #    axis gets >= min_row_steps grid steps (pipelining + megacore sharding).
    max_rows = max(8, (budget_bytes // (2 * s_tile * d * itemsize)) // 8 * 8)
    want_rows = _round_up(max(1, -(-bh // min_row_steps)), 8)
    rows = max(8, min(max_rows, want_rows))
    bh_pad = _round_up(bh, rows)
    return rows, s_tile, bh_pad, s_pad


def model_forward(x1, x2, w_t, bias, *, budget_bytes=24 << 20):
    """Faithful forward of the PyTorch Model.

    x1, x2: (B, H, S, D) float32   (S1 == S2 == d_model == S is implied by the
                                     module: Linear(d_model,1) acts on S2 and
                                     the final matmul needs S1 == S2).
    w_t:    (S, 1)  == Linear(d_model=S, 1).weight.T
    bias:   (1, 1)
    Returns (B, 1, H, D) float32.

    x1 / w_t / bias are accepted for interface fidelity, but because the
    softmax is over a size-1 axis they cannot influence the result, so they
    are never transferred to the TPU kernel.
    """
    B, H, S, D = x2.shape
    assert x1.shape == (B, H, S, D), (x1.shape, x2.shape)
    assert w_t.shape == (S, 1), w_t.shape
    assert bias.shape == (1, 1), bias.shape

    bh = B * H
    itemsize = jnp.dtype(x2.dtype).itemsize
    rows, s_tile, bh_pad, s_pad = _plan_tiling(bh, S, D, itemsize, budget_bytes)

    x2f = x2.reshape(bh, S, D)
    if bh_pad != bh or s_pad != S:
        # Zero padding is exact for a sum.
        x2f = jnp.pad(x2f, ((0, bh_pad - bh), (0, s_pad - S), (0, 0)))

    grid = (bh_pad // rows, s_pad // s_tile)

    out = pl.pallas_call(
        _colsum_kernel,
        out_shape=jax.ShapeDtypeStruct((bh_pad, D), jnp.float32),
        grid_spec=pltpu.PrefetchScalarGridSpec(
            num_scalar_prefetch=0,
            grid=grid,
            in_specs=[pl.BlockSpec((rows, s_tile, D), lambda i, s: (i, s, 0))],
            out_specs=pl.BlockSpec((rows, D), lambda i, s: (i, 0)),
            scratch_shapes=[pltpu.VMEM((rows, D), jnp.float32)],
        ),
        compiler_params=pltpu.CompilerParams(
            dimension_semantics=("parallel", "arbitrary"),
            vmem_limit_bytes=40 << 20,
        ),
        cost_estimate=pl.CostEstimate(
            flops=bh_pad * s_pad * D,
            transcendentals=0,
            bytes_accessed=bh_pad * s_pad * D * itemsize + bh_pad * D * 4,
        ),
    )(x2f)

    out = out[:bh]
    # (B*H, D) -> (B, H, D) -> (B, 1, H, D)   (== .transpose(1, 2) of (B,H,1,D))
    return out.reshape(B, H, D)[:, None, :, :]


def reference(x1, x2, w_t, bias):
    """Straightforward JAX transcription of the full PyTorch forward."""
    d = x1.shape[-1]
    v1 = jnp.einsum('bhqd,bhkd->bhqk', x1, x2) / math.sqrt(d)
    logits = jnp.einsum('bhqk,ko->bhqo', v1, w_t) + bias[0, 0]
    v2 = jax.nn.softmax(logits, axis=-1)
    v2 = jnp.swapaxes(v2, -1, -2)
    v3 = jnp.einsum('bhok,bhkd->bhod', v2, x2)
    return jnp.transpose(v3, (0, 2, 1, 3))


if __name__ == "__main__":
    # Small shapes consistent with the module: S1 == S2 == d_model == S.
    # B*H = 15 deliberately exercises the zero-padding path.
    B, H, S, D = 3, 5, 16, 32          # nheads = H, d_model = S
    key = jax.random.PRNGKey(0)
    k1, k2, k3, k4 = jax.random.split(key, 4)

    x1 = jax.random.normal(k1, (B, H, S, D), dtype=jnp.float32)
    x2 = jax.random.normal(k2, (B, H, S, D), dtype=jnp.float32)

    # att_weights = nn.Linear(d_model=S, 1): weight (1, S), bias (1,)
    bound = 1.0 / math.sqrt(S)
    w = jax.random.uniform(k3, (1, S), jnp.float32, -bound, bound)
    b = jax.random.uniform(k4, (1,), jnp.float32, -bound, bound)
    w_t = w.T                           # (S, 1) for the wrapper
    bias = b.reshape(1, 1)              # (1, 1) for the wrapper

    ref = jax.block_until_ready(reference(x1, x2, w_t, bias))

    # Default (large-block) path.
    out = jax.block_until_ready(model_forward(x1, x2, w_t, bias))
    assert out.shape == (B, 1, H, D), out.shape
    assert jnp.allclose(out, ref, atol=1e-4, rtol=1e-4)

    # Force the S-tiled / padded reduction path with a tiny VMEM budget.
    out_tiled = jax.block_until_ready(
        model_forward(x1, x2, w_t, bias, budget_bytes=1 << 14))
    assert jnp.allclose(out_tiled, ref, atol=1e-4, rtol=1e-4)

    print("KERNEL_OK")
</pallas_src>

<mosaic_0001>
module attributes {stable_mosaic.version = 11 : i64} {
  func.func @_colsum_kernel(%arg0: i32, %arg1: i32, %arg2: memref<8x16x32xf32, #tpu.memory_space<vmem>>, %arg3: memref<8x32xf32, #tpu.memory_space<vmem>>, %arg4: memref<8x32xf32, #tpu.memory_space<vmem>>) attributes {dimension_semantics = [#tpu.dimension_semantics<parallel>, #tpu.dimension_semantics<arbitrary>], iteration_bounds = array<i64: 2, 1>, scalar_prefetch = 0 : i64, scratch_operands = 1 : i64, tpu.core_type = #tpu.core_type<tc>, window_params = [{transform_indices = @transform_0, window_bounds = array<i64: 8, 16, 32>}, {transform_indices = @transform_1, window_bounds = array<i64: 8, 32>}]} {
    %c0_i32 = arith.constant 0 : i32
    %0 = arith.cmpi eq, %arg1, %c0_i32 : i32
    %1 = arith.extui %0 : i1 to i32
    %c0_i32_0 = arith.constant 0 : i32
    %2 = arith.cmpi ne, %1, %c0_i32_0 : i32
    scf.if %2 {
      %cst_9 = arith.constant 0.000000e+00 : f32
      %11 = vector.broadcast %cst_9 : f32 to vector<8x32xf32>
      %c0_10 = arith.constant 0 : index
      %c0_11 = arith.constant 0 : index
      %12 = vector.load %arg4[%c0_10, %c0_11] : memref<8x32xf32, #tpu.memory_space<vmem>>, vector<8x32xf32>
      tpu.vector_store %arg4[%c0_10, %c0_11], %11 {strides = array<i32>} : memref<8x32xf32, #tpu.memory_space<vmem>>, vector<8x32xf32>,
    } else {
    }
    %c0 = arith.constant 0 : index
    %c0_1 = arith.constant 0 : index
    %3 = vector.load %arg4[%c0, %c0_1] : memref<8x32xf32, #tpu.memory_space<vmem>>, vector<8x32xf32>
    %c0_2 = arith.constant 0 : index
    %c0_3 = arith.constant 0 : index
    %c0_4 = arith.constant 0 : index
    %4 = vector.load %arg2[%c0_2, %c0_3, %c0_4] : memref<8x16x32xf32, #tpu.memory_space<vmem>>, vector<8x16x32xf32>
    %cst = arith.constant dense<0.000000e+00> : vector<8x32xf32>
    %5 = vector.multi_reduction <add>, %4, %cst [1] : vector<8x16x32xf32> to vector<8x32xf32>
    %6 = arith.addf %3, %5 : vector<8x32xf32>
    %c0_5 = arith.constant 0 : index
    %c0_6 = arith.constant 0 : index
    %7 = vector.load %arg4[%c0_5, %c0_6] : memref<8x32xf32, #tpu.memory_space<vmem>>, vector<8x32xf32>
    tpu.vector_store %arg4[%c0_5, %c0_6], %6 {strides = array<i32>} : memref<8x32xf32, #tpu.memory_space<vmem>>, vector<8x32xf32>,
    %c0_i32_7 = arith.constant 0 : i32
    %8 = arith.cmpi eq, %arg1, %c0_i32_7 : i32
    %9 = arith.extui %8 : i1 to i32
    %c0_i32_8 = arith.constant 0 : i32
    %10 = arith.cmpi ne, %9, %c0_i32_8 : i32
    scf.if %10 {
      %c0_9 = arith.constant 0 : index
      %c0_10 = arith.constant 0 : index
      %11 = vector.load %arg4[%c0_9, %c0_10] : memref<8x32xf32, #tpu.memory_space<vmem>>, vector<8x32xf32>
      %c0_11 = arith.constant 0 : index
      %c0_12 = arith.constant 0 : index
      %12 = vector.load %arg3[%c0_11, %c0_12] : memref<8x32xf32, #tpu.memory_space<vmem>>, vector<8x32xf32>
      tpu.vector_store %arg3[%c0_11, %c0_12], %11 {strides = array<i32>} : memref<8x32xf32, #tpu.memory_space<vmem>>, vector<8x32xf32>,
    } else {
    }
    return
  }
  func.func @transform_0(%arg0: i32, %arg1: i32) -> (i32, i32, i32) {
    %c0_i32 = arith.constant 0 : i32
    %c0_i32_0 = arith.constant 0 : i32
    return %arg0, %arg1, %c0_i32 : i32, i32, i32
  }
  func.func @transform_1(%arg0: i32, %arg1: i32) -> (i32, i32) {
    %c0_i32 = arith.constant 0 : i32
    %c0_i32_0 = arith.constant 0 : i32
    return %arg0, %c0_i32 : i32, i32
  }
}

</mosaic_0001>

<llo_original>
// kernel: tpu_custom_call.1
$region0: #{tpu_custom_call.1}
  #allocation0 [shape = 'u32[]', space=smem, size = 0x4, offset = 0x4, fixed_abs, tag = 'smem constant byte address 0x4 - core index']
  #allocation1 [shape = 'u32[144,128]{1,0:T(1,128)}', space=vmem, size = 0x12000, scoped, tag = 'internal scratch']
  #allocation2 [shape = 'f32[8,32]{1,0:T(8,128)}', space=vmem, size = 0x1000, scoped, tag = 'scratch operand']
  %s0 = inlined_call_operand.hbm [shape: f32[16,16,32], index: 0, kind: input, shape index: {}]
  %s1 = inlined_call_operand.hbm [shape: f32[16,32], index: 1, kind: output, shape index: {}]
  %s2 = sld [smem:[#allocation0]]
  $region49: #{tpu_custom_call.1} parent=0
    _
  %s4 = ssub.s32 1, %s2
  %s5 = scalar_select 0, %s4, %s2
  $region1: #{tpu_custom_call.1} parent=0
    #allocation3 [shape = 'u8[131072]{0}', space=vmem, size = 0x20000, scoped, tag = 'input window, operand 0']
    #allocation4 [shape = 's32[2]{0}', space=sflag, size = 0x8, scoped, tag = 'scoped memory for tpu_custom_call.1']
    #allocation5 [shape = 's32[2]{0}', space=sflag, size = 0x8, scoped, tag = 'scoped memory for tpu_custom_call.1']
    #allocation6 [shape = 'u8[8192]{0}', space=vmem, size = 0x2000, scoped, tag = 'output window, operand 0']
    %6 = vsyncpa [#allocation4], 0
    %s7 = scalar_lea.sflag [#allocation4], 1
    %8 = vsyncpa %s7, 0
    %9 = vsyncpa [#allocation5], 0
    %s10 = scalar_lea.sflag [#allocation5], 1
    %11 = vsyncpa %s10, 0
    loop: start=0, step=1, limit=4
    $region2: #{tpu_custom_call.1} parent=1 // loop_pre_header
      _
    $region3: #{tpu_custom_call.1} parent=1 // loop_header
      %s13 = sphi 0, %s17
      %p14 = scmp.ge.s32.totalorder %s13, 4
      %s20 = sphi 0, %s32
      %s21 = sphi 0, %s28
      %s22 = sphi 0, %s20
      %s23 = sphi 0, %s21
      %s24 = sphi 0, %s22
      %s25 = sphi 0, %s23
      %s37 = sphi 0, %s39
      %s40 = sphi 0, %s37
      %s41 = sphi 0, %s40
      %s57 = sphi 0, %s41
      %s63 = sphi 0, %s65
      %s66 = sphi 0, %s63
      %s67 = sphi 0, %s66
      %s83 = sphi 0, %s67
    $region4: #{tpu_custom_call.1} parent=1 // loop_header_branch
      %16 = sbr.rel (%p14) target = $region8
    $region5: #{tpu_custom_call.1} parent=1 // loop_body
      %s18 = ssub.s32 %s13, 1
      %s19 = ssub.s32 %s13, 2
      %s26 = sadd.s32 1, %s21
      %p27 = scmp.ge.s32.totalorder %s26, 1
      %s28 = scalar_select %p27, 0, %s26
      %s29 = sadd.s32 1, %s20
      %s30 = scalar_select %p27, %s29, %s20
      %p31 = scmp.ge.s32.totalorder %s30, 2
      %s32 = scalar_select %p31, 0, %s30
      %s33 = ssub.s32 %s20, %s32
      %s34 = ssub.s32 %s21, %s28
      %s35 = sor.u32 %s33, %s34
      %p36 = scmp.eq.s32.totalorder %s35, 0
      %s38 = sadd.s32 %s37, 1
      %s39 = scalar_select %p36, %s37, %s38
      %p42 = pneg %p36
      %p43 = scmp.eq.s32.totalorder %s13, 1
      %p44 = por %p42, %p43
      %p45 = scmp.ne.s32.totalorder %s37, %s40
      %p46 = scmp.eq.s32.totalorder %s13, 0
      %p47 = por %p45, %p46
      %p48 = scmp.ne.s32.totalorder %s37, %s40
      %p49 = scmp.eq.s32.totalorder %s18, 1
      %p50 = por %p48, %p49
      %p51 = scmp.ne.s32.totalorder %s40, %s41
      %p52 = scmp.eq.s32.totalorder %s18, 0
      %p53 = por %p51, %p52
      %p54 = scmp.ne.s32.totalorder %s40, %s41
      %p55 = scmp.eq.s32.totalorder %s19, 1
      %p56 = por %p54, %p55
      %p58 = scmp.ne.s32.totalorder %s41, %s57
      %p59 = scmp.eq.s32.totalorder %s19, 0
      %p60 = por %p58, %p59
      %s61 = ssub.s32 %s20, %s32
      %p62 = scmp.eq.s32.totalorder %s61, 0
      %s64 = sadd.s32 %s63, 1
      %s65 = scalar_select %p62, %s63, %s64
      %p68 = pneg %p62
      %p69 = scmp.eq.s32.totalorder %s13, 1
      %p70 = por %p68, %p69
      %p71 = scmp.ne.s32.totalorder %s63, %s66
      %p72 = scmp.eq.s32.totalorder %s13, 0
      %p73 = por %p71, %p72
      %p74 = scmp.ne.s32.totalorder %s63, %s66
      %p75 = scmp.eq.s32.totalorder %s18, 1
      %p76 = por %p74, %p75
      %p77 = scmp.ne.s32.totalorder %s66, %s67
      %p78 = scmp.eq.s32.totalorder %s18, 0
      %p79 = por %p77, %p78
      %p80 = scmp.ne.s32.totalorder %s66, %s67
      %p81 = scmp.eq.s32.totalorder %s19, 1
      %p82 = por %p80, %p81
      %p84 = scmp.ne.s32.totalorder %s67, %s83
      %p85 = scmp.eq.s32.totalorder %s19, 0
      %p86 = por %p84, %p85
      %p87 = scmp.le.s32.totalorder 1, %s13
      %p88 = scmp.lt.s32.totalorder %s13, 3
      %p89 = pnand %p87, %p88
      %p90 = pneg %p89
      // Predicated region
      $region9: #{tpu_custom_call.1} parent=5 // pred_check
        _
      $region10: #{tpu_custom_call.1} parent=5 // pred_check_branch
        %92 = sbr.rel (%p89) target = $region12
      $region11: #{tpu_custom_call.1} parent=5 // pred_region
        %s93 = ssub.s32 %s13, 1
      $region12: #{tpu_custom_call.1} parent=5 // pred_fallthru
        _
      %p94 = scmp.lt.s32.totalorder %s13, 2
      // Predicated region
      $region13: #{tpu_custom_call.1} parent=5 // pred_check
        %p95 = pneg %p94
      $region14: #{tpu_custom_call.1} parent=5 // pred_check_branch
        %97 = sbr.rel (%p95) target = $region16
      $region15: #{tpu_custom_call.1} parent=5 // pred_region
        // Predicated region
        $region17: #{tpu_custom_call.1} parent=15 // pred_check
          %p98 = pneg %p47
        $region18: #{tpu_custom_call.1} parent=15 // pred_check_branch
          %100 = sbr.rel (%p98) target = $region20
        $region19: #{tpu_custom_call.1} parent=15 // pred_region
          %s101 = sand.u32 %s37, 1
          %s102 = scalar_lea.sflag [#allocation4], %s101
          %s103 = sand.u32 %s37, 1
          %s104 = smul.addr %s103, 128
          %s105 = scalar_lea.vmem [#allocation3], %s104
          %s106 = smul.u32 8, %s20
          %s107 = smul.u32 2, %s21
          %s109 = ssub.s32 2048, 2048
          %110 = vsyncadd %s102, %s109
          %s111 = smul.addr %s106, 2
          %s112 = sadd.s32 %s107, %s111
          %s113 = smul.addr %s112, 128
          %s114 = scalar_lea.hbm %s0, %s113
          %s115 = sshll.u32 %s105, 4
          %s116 = int_to_ptr.vmem [resolvable:$true] %s115
          %121 = dma.hbm_to_vmem [thread:$0]  %s114, 2048, %s116, %s102, 128, 128, 8
        $region20: #{tpu_custom_call.1} parent=15 // pred_fallthru
          _
      $region16: #{tpu_custom_call.1} parent=5 // pred_fallthru
        _
      %p122 = scmp.le.s32.totalorder 1, %s13
      %p123 = scmp.lt.s32.totalorder %s13, 3
      %p124 = pnand %p122, %p123
      %p125 = pneg %p124
      // Predicated region
      $region21: #{tpu_custom_call.1} parent=5 // pred_check
        _
      $region22: #{tpu_custom_call.1} parent=5 // pred_check_branch
        %127 = sbr.rel (%p124) target = $region24
      $region23: #{tpu_custom_call.1} parent=5 // pred_region
        %s128 = ssub.s32 %s13, 1
        %s129 = sand.u32 %s40, 1
        %s130 = scalar_lea.sflag [#allocation4], %s129
        %s131 = sand.u32 %s40, 1
        %s132 = smul.addr %s131, 128
        %s133 = scalar_lea.vmem [#allocation3], %s132
        // Predicated region
        $region25: #{tpu_custom_call.1} parent=23 // pred_check
          %p134 = pneg %p53
        $region26: #{tpu_custom_call.1} parent=23 // pred_check_branch
          %136 = sbr.rel (%p134) target = $region28
        $region27: #{tpu_custom_call.1} parent=23 // pred_region
          %137 = dma.done %s130, 2048
        $region28: #{tpu_custom_call.1} parent=23 // pred_fallthru
          _
        %s138 = sand.u32 %s40, 1
        %s139 = scalar_lea.sflag [#allocation4], %s138
        %s140 = sand.u32 %s40, 1
        %s141 = smul.addr %s140, 128
        %s142 = scalar_lea.vmem [#allocation3], %s141
        %p143 = pneg %p53
        %p144 = pneg %p50
        %p145 = pneg %p79
        %p146 = pneg %p76
        %s147 = sand.u32 %s66, 1
        %s148 = scalar_lea.sflag [#allocation5], %s147
        %s149 = sand.u32 %s66, 1
        %s150 = smul.addr %s149, 8
        %s151 = scalar_lea.vmem [#allocation6], %s150
        %s152 = smul.u32 8, %s22
        %s153 = smul.u32 2, %s23
        %p154 = scmp.eq.s32.totalorder %s23, 0
        // Predicated region
        $region29: #{tpu_custom_call.1} parent=23 // pred_check
          %p155 = pneg %p154
        $region30: #{tpu_custom_call.1} parent=23 // pred_check_branch
          %157 = sbr.rel (%p155) target = $region32
        $region31: #{tpu_custom_call.1} parent=23 // pred_region
          %vm158 = vcmask 261120
          %159 = vst.msk [vmem:[#allocation2] sm:$0xff] %vm158, 0.0
        $region32: #{tpu_custom_call.1} parent=23 // pred_fallthru
          _
        %v160 = vld [vmem:[#allocation2] sm:$0xff]
        %v161 = vld [vmem:[%s133] sm:$0xff]
        %v162 = vld [vmem:[%s133 + $0x8] sm:$0xff]
        %v163 = vld [vmem:[%s133 + $0x10] sm:$0xff]
        %v164 = vld [vmem:[%s133 + $0x18] sm:$0xff]
        %v165 = vld [vmem:[%s133 + $0x20] sm:$0xff]
        %v166 = vld [vmem:[%s133 + $0x28] sm:$0xff]
        %v167 = vld [vmem:[%s133 + $0x30] sm:$0xff]
        %v168 = vld [vmem:[%s133 + $0x38] sm:$0xff]
        %v169 = vld [vmem:[%s133 + $0x40] sm:$0xff]
        %v170 = vld [vmem:[%s133 + $0x48] sm:$0xff]
        %v171 = vld [vmem:[%s133 + $0x50] sm:$0xff]
        %v172 = vld [vmem:[%s133 + $0x58] sm:$0xff]
        %v173 = vld [vmem:[%s133 + $0x60] sm:$0xff]
        %v174 = vld [vmem:[%s133 + $0x68] sm:$0xff]
        %v175 = vld [vmem:[%s133 + $0x70] sm:$0xff]
        %v176 = vld [vmem:[%s133 + $0x78] sm:$0xff]
        %vm177 = vcmask 261120
        %v178 = vsel %vm177, %v161, 0.0
        %v179 = vsel %vm177, %v162, 0.0
        %v180 = vadd.f32 %v178, %v179
        %v181 = vrot.slane %v180, 4
        %v182 = vadd.f32 %v180, %v181
        %v183 = vrot.slane %v182, 2
        %v184 = vadd.f32 %v182, %v183
        %v185 = vrot.slane %v184, 1
        %v186 = vadd.f32 %v184, %v185
        %v187 = vsel %vm177, %v163, 0.0
        %v188 = vsel %vm177, %v164, 0.0
        %v189 = vadd.f32 %v187, %v188
        %v190 = vrot.slane %v189, 4
        %v191 = vadd.f32 %v189, %v190
        %v192 = vrot.slane %v191, 2
        %v193 = vadd.f32 %v191, %v192
        %v194 = vrot.slane %v193, 1
        %v195 = vadd.f32 %v193, %v194
        %v196 = vsel %vm177, %v165, 0.0
        %v197 = vsel %vm177, %v166, 0.0
        %v198 = vadd.f32 %v196, %v197
        %v199 = vrot.slane %v198, 4
        %v200 = vadd.f32 %v198, %v199
        %v201 = vrot.slane %v200, 2
        %v202 = vadd.f32 %v200, %v201
        %v203 = vrot.slane %v202, 1
        %v204 = vadd.f32 %v202, %v203
        %v205 = vsel %vm177, %v167, 0.0
        %v206 = vsel %vm177, %v168, 0.0
        %v207 = vadd.f32 %v205, %v206
        %v208 = vrot.slane %v207, 4
        %v209 = vadd.f32 %v207, %v208
        %v210 = vrot.slane %v209, 2
        %v211 = vadd.f32 %v209, %v210
        %v212 = vrot.slane %v211, 1
        %v213 = vadd.f32 %v211, %v212
        %v214 = vsel %vm177, %v169, 0.0
        %v215 = vsel %vm177, %v170, 0.0
        %v216 = vadd.f32 %v214, %v215
        %v217 = vrot.slane %v216, 4
        %v218 = vadd.f32 %v216, %v217
        %v219 = vrot.slane %v218, 2
        %v220 = vadd.f32 %v218, %v219
        %v221 = vrot.slane %v220, 1
        %v222 = vadd.f32 %v220, %v221
        %v223 = vsel %vm177, %v171, 0.0
        %v224 = vsel %vm177, %v172, 0.0
        %v225 = vadd.f32 %v223, %v224
        %v226 = vrot.slane %v225, 4
        %v227 = vadd.f32 %v225, %v226
        %v228 = vrot.slane %v227, 2
        %v229 = vadd.f32 %v227, %v228
        %v230 = vrot.slane %v229, 1
        %v231 = vadd.f32 %v229, %v230
        %v232 = vsel %vm177, %v173, 0.0
        %v233 = vsel %vm177, %v174, 0.0
        %v234 = vadd.f32 %v232, %v233
        %v235 = vrot.slane %v234, 4
        %v236 = vadd.f32 %v234, %v235
        %v237 = vrot.slane %v236, 2
        %v238 = vadd.f32 %v236, %v237
        %v239 = vrot.slane %v238, 1
        %v240 = vadd.f32 %v238, %v239
        %v241 = vsel %vm177, %v175, 0.0
        %v242 = vsel %vm177, %v176, 0.0
        %v243 = vadd.f32 %v241, %v242
        %v244 = vrot.slane %v243, 4
        %v245 = vadd.f32 %v243, %v244
        %v246 = vrot.slane %v245, 2
        %v247 = vadd.f32 %v245, %v246
        %v248 = vrot.slane %v247, 1
        %v249 = vadd.f32 %v247, %v248
        %vm258 = vcmask 1041409
        %v259 = vsel %vm258, %v195, %v186
        %vm260 = vcmask 1042434
        %v261 = vsel %vm260, %v204, %v259
        %vm262 = vcmask 1043459
        %v263 = vsel %vm262, %v213, %v261
        %vm264 = vcmask 1044484
        %v265 = vsel %vm264, %v222, %v263
        %vm266 = vcmask 1045509
        %v267 = vsel %vm266, %v231, %v265
        %vm268 = vcmask 1046534
        %v269 = vsel %vm268, %v240, %v267
        %vm270 = vcmask 1047559
        %v271 = vsel %vm270, %v249, %v269
        %v273 = vadd.f32 %v160, %v271
        %274 = vst.msk [vmem:[#allocation2] sm:$0xff] %vm177, %v273
        // Predicated region
        $region33: #{tpu_custom_call.1} parent=23 // pred_check
          %p275 = pneg %p154
        $region34: #{tpu_custom_call.1} parent=23 // pred_check_branch
          %277 = sbr.rel (%p275) target = $region36
        $region35: #{tpu_custom_call.1} parent=23 // pred_region
          %v278 = vld [vmem:[#allocation2] sm:$0xff]
          %279 = vst.msk [vmem:[%s151] sm:$0xff] %vm177, %v278
        $region36: #{tpu_custom_call.1} parent=23 // pred_fallthru
          _
        %s280 = sand.u32 %s66, 1
        %s281 = scalar_lea.sflag [#allocation5], %s280
        %s282 = sand.u32 %s66, 1
        %s283 = smul.addr %s282, 8
        %s284 = scalar_lea.vmem [#allocation6], %s283
        // Predicated region
        $region37: #{tpu_custom_call.1} parent=23 // pred_check
          %p285 = pneg %p76
        $region38: #{tpu_custom_call.1} parent=23 // pred_check_branch
          %287 = sbr.rel (%p285) target = $region40
        $region39: #{tpu_custom_call.1} parent=23 // pred_region
          %s289 = ssub.s32 128, 128
          %290 = vsyncadd %s281, %s289
          %s291 = smul.addr %s22, 128
          %s292 = scalar_lea.hbm %s1, %s291
          %s294 = sshll.u32 %s284, 4
          %s295 = int_to_ptr.vmem [resolvable:$true] %s294
          %297 = dma.vmem_to_hbm [thread:$0]  %s295, 128, %s292, %s281
        $region40: #{tpu_custom_call.1} parent=23 // pred_fallthru
          _
      $region24: #{tpu_custom_call.1} parent=5 // pred_fallthru
        _
      %p298 = scmp.le.s32.totalorder 2, %s13
      // Predicated region
      $region41: #{tpu_custom_call.1} parent=5 // pred_check
        %p299 = pneg %p298
      $region42: #{tpu_custom_call.1} parent=5 // pred_check_branch
        %301 = sbr.rel (%p299) target = $region44
      $region43: #{tpu_custom_call.1} parent=5 // pred_region
        %s302 = ssub.s32 %s13, 2
        // Predicated region
        $region45: #{tpu_custom_call.1} parent=43 // pred_check
          %p303 = pneg %p82
        $region46: #{tpu_custom_call.1} parent=43 // pred_check_branch
          %305 = sbr.rel (%p303) target = $region48
        $region47: #{tpu_custom_call.1} parent=43 // pred_region
          %s306 = sand.u32 %s67, 1
          %s307 = scalar_lea.sflag [#allocation5], %s306
          %s308 = sand.u32 %s67, 1
          %s309 = smul.addr %s308, 8
          %s310 = scalar_lea.vmem [#allocation6], %s309
          %311 = dma.done %s307, 128
        $region48: #{tpu_custom_call.1} parent=43 // pred_fallthru
          _
      $region44: #{tpu_custom_call.1} parent=5 // pred_fallthru
        _
    $region6: #{tpu_custom_call.1} parent=1 // loop_footer
      %s17 = sadd.s32 1, %s13
    $region7: #{tpu_custom_call.1} parent=1 // loop_footer_branch
      %12 = sbr.rel target = $region3
    $region8: #{tpu_custom_call.1} parent=1 // loop_exit
      _
    %312 = vsyncpa [#allocation4], 1
    %s313 = scalar_lea.sflag [#allocation4], 1
    %314 = vsyncpa %s313, 1
    %315 = vsyncpa [#allocation5], 1
    %s316 = scalar_lea.sflag [#allocation5], 1
    %317 = vsyncpa %s316, 1

</llo_original>
